<compile_context>
chip_gen: v6e
topology: v6e:2x2x1
jax: 0.10.0
libtpu: 0.0.40
codegen_flags: <defaults>
</compile_context>

<pallas_src>
import functools

import numpy as np
import jax
import jax.numpy as jnp
from jax.experimental import pallas as pl
from jax.experimental.pallas import tpu as pltpu


_LANES = 128                      # vreg lane width (v5e/v6e/v7x)
_PACKED_BLOCK_ROWS = 1024         # rows of the packed (., 128) view per grid step
_SIMPLE_BLOCK_ROWS = 4096         # rows of the (., C) view per grid step
_VMEM_LIMIT = 32 * 1024 * 1024    # explicit scoped-VMEM budget (safe on v5e..v7x)


def _round_up(x, m):
    return (x + m - 1) // m * m


# ---------------------------------------------------------------------------
# kernels
# ---------------------------------------------------------------------------
def _ln_packed_kernel(x_ref, a_ref, b_ref, mmean_ref, mones_ref, o_ref, *, c, eps):
    """Lane-dense path: each 128-lane row holds G = 128//C samples.

    Per-sample (per-segment) mean and sum-of-squares are computed with
    block-diagonal 128x128 matmuls (MXU), keeping every VPU op / store dense.
    """
    xv = x_ref[...]                                                   # (TB, 128)
    mu = jnp.dot(xv, mmean_ref[...], preferred_element_type=jnp.float32)
    d = xv - mu
    ss = jnp.dot(d * d, mones_ref[...], preferred_element_type=jnp.float32)
    std = jnp.sqrt(ss * (1.0 / (c - 1)))                              # unbiased
    inv = pl.reciprocal(std + eps, approx=True)                       # EUP
    o_ref[...] = a_ref[...] * d * inv + b_ref[...]


def _ln_rows_kernel(x_ref, a_ref, b_ref, o_ref, *, c, eps):
    """General fallback: reduce over the (full) last dim of each row block."""
    xv = x_ref[...]                                                   # (TB, C)
    mu = jnp.mean(xv, axis=-1, keepdims=True)
    d = xv - mu
    var = jnp.sum(d * d, axis=-1, keepdims=True) * (1.0 / (c - 1))    # unbiased
    inv = pl.reciprocal(jnp.sqrt(var) + eps, approx=True)             # EUP
    o_ref[...] = a_ref[...] * d * inv + b_ref[...]


# ---------------------------------------------------------------------------
# wrapper
# ---------------------------------------------------------------------------
def layer_norm(x, a_2, b_2, eps=1e-6):
    orig_shape = x.shape
    orig_dtype = x.dtype
    c = orig_shape[-1]

    x2 = x.reshape(-1, c).astype(jnp.float32)
    n = x2.shape[0]
    a2 = a_2.astype(jnp.float32).reshape(1, c)
    b2 = b_2.astype(jnp.float32).reshape(1, c)

    cparams = pltpu.CompilerParams(
        dimension_semantics=("parallel",),        # megacore / 2-TC sharding
        vmem_limit_bytes=_VMEM_LIMIT,
    )

    if c < _LANES and _LANES % c == 0:
        # ---- packed, lane-dense path -------------------------------------
        g = _LANES // c
        w = g * c                                  # == 128
        np_raw = pl.cdiv(n, g)                     # packed rows needed
        num_blocks = max(1, pl.cdiv(np_raw, _PACKED_BLOCK_ROWS))
        tb = _round_up(pl.cdiv(np_raw, num_blocks), 8)
        np_rows = num_blocks * tb
        n_pad = np_rows * g
        if n_pad != n:
            x2 = jnp.pad(x2, ((0, n_pad - n), (0, 0)))
        xp = x2.reshape(np_rows, w)                # free (row-major) reshape

        a_t = jnp.tile(a2, (1, g))                 # (1, 128)
        b_t = jnp.tile(b2, (1, g))
        seg = np.arange(w) // c
        mones = (seg[:, None] == seg[None, :]).astype(np.float32)      # (128,128)
        mmean = (mones / float(c)).astype(np.float32)

        out = pl.pallas_call(
            functools.partial(_ln_packed_kernel, c=c, eps=float(eps)),
            out_shape=jax.ShapeDtypeStruct((np_rows, w), jnp.float32),
            grid=(num_blocks,),
            in_specs=[
                pl.BlockSpec((tb, w), lambda i: (i, 0)),
                pl.BlockSpec((1, w), lambda i: (0, 0)),
                pl.BlockSpec((1, w), lambda i: (0, 0)),
                pl.BlockSpec((w, w), lambda i: (0, 0)),
                pl.BlockSpec((w, w), lambda i: (0, 0)),
            ],
            out_specs=pl.BlockSpec((tb, w), lambda i: (i, 0)),
            compiler_params=cparams,
        )(xp, a_t, b_t, jnp.asarray(mmean), jnp.asarray(mones))
        out = out.reshape(n_pad, c)[:n]
    else:
        # ---- general fallback (C is the full last dim of the block) ------
        num_blocks = max(1, pl.cdiv(n, _SIMPLE_BLOCK_ROWS))
        tb = _round_up(pl.cdiv(n, num_blocks), 8)
        n_pad = num_blocks * tb
        if n_pad != n:
            x2 = jnp.pad(x2, ((0, n_pad - n), (0, 0)))

        out = pl.pallas_call(
            functools.partial(_ln_rows_kernel, c=c, eps=float(eps)),
            out_shape=jax.ShapeDtypeStruct((n_pad, c), jnp.float32),
            grid=(num_blocks,),
            in_specs=[
                pl.BlockSpec((tb, c), lambda i: (i, 0)),
                pl.BlockSpec((1, c), lambda i: (0, 0)),
                pl.BlockSpec((1, c), lambda i: (0, 0)),
            ],
            out_specs=pl.BlockSpec((tb, c), lambda i: (i, 0)),
            compiler_params=cparams,
        )(x2, a2, b2)
        out = out[:n]

    return out.reshape(orig_shape).astype(orig_dtype)


# ---------------------------------------------------------------------------
# pure-JAX reference (torch semantics: unbiased std, std + eps)
# ---------------------------------------------------------------------------
def _layer_norm_ref(x, a_2, b_2, eps=1e-6):
    mean = jnp.mean(x, axis=-1, keepdims=True)
    var = jnp.sum((x - mean) ** 2, axis=-1, keepdims=True) / (x.shape[-1] - 1)
    return a_2 * (x - mean) / (jnp.sqrt(var) + eps) + b_2


# ---------------------------------------------------------------------------
if __name__ == "__main__":
    key = jax.random.PRNGKey(0)
    k1, k2, k3, k4 = jax.random.split(key, 4)

    # GraFormer-style activations: [batch, frames, joints, hidden]
    B, F, J, C = 2, 2, 17, 32
    x = jax.random.normal(k1, (B, F, J, C), jnp.float32)
    a_2 = 1.0 + 0.1 * jax.random.normal(k2, (C,), jnp.float32)
    b_2 = 0.05 * jax.random.normal(k3, (C,), jnp.float32)

    out = jax.block_until_ready(layer_norm(x, a_2, b_2))
    ref = _layer_norm_ref(x, a_2, b_2)
    assert out.shape == x.shape
    assert bool(jnp.all(jnp.isfinite(out)))
    assert float(jnp.max(jnp.abs(out - ref))) < 5e-2

    # exercise the general fallback path too (C does not divide 128)
    C2 = 48
    x2 = jax.random.normal(k4, (3, 5, C2), jnp.float32)
    a22 = jnp.ones((C2,), jnp.float32)
    b22 = jnp.zeros((C2,), jnp.float32)
    out2 = jax.block_until_ready(layer_norm(x2, a22, b22))
    ref2 = _layer_norm_ref(x2, a22, b22)
    assert out2.shape == x2.shape
    assert bool(jnp.all(jnp.isfinite(out2)))
    assert float(jnp.max(jnp.abs(out2 - ref2))) < 5e-2

    print("KERNEL_OK")
</pallas_src>

<mosaic_0001>
module attributes {stable_mosaic.version = 11 : i64} {
  func.func @_ln_packed_kernel(%arg0: i32, %arg1: memref<24x128xf32, #tpu.memory_space<vmem>>, %arg2: memref<1x128xf32, #tpu.memory_space<vmem>>, %arg3: memref<1x128xf32, #tpu.memory_space<vmem>>, %arg4: memref<128x128xf32, #tpu.memory_space<vmem>>, %arg5: memref<128x128xf32, #tpu.memory_space<vmem>>, %arg6: memref<24x128xf32, #tpu.memory_space<vmem>>) attributes {dimension_semantics = [#tpu.dimension_semantics<parallel>], iteration_bounds = array<i64: 1>, scalar_prefetch = 0 : i64, scratch_operands = 0 : i64, tpu.core_type = #tpu.core_type<tc>, window_params = [{transform_indices = @transform_0, window_bounds = array<i64: 24, 128>}, {pipeline_mode = #tpu.pipeline_mode<synchronous>, transform_indices = @transform_1, window_bounds = array<i64: 1, 128>}, {pipeline_mode = #tpu.pipeline_mode<synchronous>, transform_indices = @transform_2, window_bounds = array<i64: 1, 128>}, {pipeline_mode = #tpu.pipeline_mode<synchronous>, transform_indices = @transform_3, window_bounds = array<i64: 128, 128>}, {pipeline_mode = #tpu.pipeline_mode<synchronous>, transform_indices = @transform_4, window_bounds = array<i64: 128, 128>}, {transform_indices = @transform_5, window_bounds = array<i64: 24, 128>}]} {
    %c0 = arith.constant 0 : index
    %c0_0 = arith.constant 0 : index
    %0 = vector.load %arg1[%c0, %c0_0] : memref<24x128xf32, #tpu.memory_space<vmem>>, vector<24x128xf32>
    %c0_1 = arith.constant 0 : index
    %c0_2 = arith.constant 0 : index
    %1 = vector.load %arg4[%c0_1, %c0_2] : memref<128x128xf32, #tpu.memory_space<vmem>>, vector<128x128xf32>
    %cst = arith.constant dense<0.000000e+00> : vector<24x128xf32>
    %2 = tpu.matmul %0, %1, %cst {dimension_numbers = #tpu.dot_dimension_numbers<[1], [0], [0], [1], [0, 0, 1, 1], [], []>} : vector<24x128xf32>, vector<128x128xf32>, vector<24x128xf32> -> vector<24x128xf32>
    %3 = arith.subf %0, %2 : vector<24x128xf32>
    %4 = arith.mulf %3, %3 : vector<24x128xf32>
    %c0_3 = arith.constant 0 : index
    %c0_4 = arith.constant 0 : index
    %5 = vector.load %arg5[%c0_3, %c0_4] : memref<128x128xf32, #tpu.memory_space<vmem>>, vector<128x128xf32>
    %cst_5 = arith.constant dense<0.000000e+00> : vector<24x128xf32>
    %6 = tpu.matmul %4, %5, %cst_5 {dimension_numbers = #tpu.dot_dimension_numbers<[1], [0], [0], [1], [0, 0, 1, 1], [], []>} : vector<24x128xf32>, vector<128x128xf32>, vector<24x128xf32> -> vector<24x128xf32>
    %cst_6 = arith.constant 0.0322580636 : f32
    %7 = vector.broadcast %cst_6 : f32 to vector<24x128xf32>
    %8 = arith.mulf %6, %7 : vector<24x128xf32>
    %9 = math.sqrt %8 : vector<24x128xf32>
    %cst_7 = arith.constant 9.99999997E-7 : f32
    %10 = vector.broadcast %cst_7 : f32 to vector<24x128xf32>
    %11 = arith.addf %9, %10 : vector<24x128xf32>
    %12 = tpu.reciprocal %11 {approx = true} : vector<24x128xf32> -> vector<24x128xf32>
    %c0_8 = arith.constant 0 : index
    %c0_9 = arith.constant 0 : index
    %13 = vector.load %arg2[%c0_8, %c0_9] : memref<1x128xf32, #tpu.memory_space<vmem>>, vector<1x128xf32>
    %14 = vector.broadcast %13 : vector<1x128xf32> to vector<24x128xf32>
    %15 = arith.mulf %14, %3 : vector<24x128xf32>
    %16 = arith.mulf %15, %12 : vector<24x128xf32>
    %c0_10 = arith.constant 0 : index
    %c0_11 = arith.constant 0 : index
    %17 = vector.load %arg3[%c0_10, %c0_11] : memref<1x128xf32, #tpu.memory_space<vmem>>, vector<1x128xf32>
    %18 = vector.broadcast %17 : vector<1x128xf32> to vector<24x128xf32>
    %19 = arith.addf %16, %18 : vector<24x128xf32>
    %c0_12 = arith.constant 0 : index
    %c0_13 = arith.constant 0 : index
    %20 = vector.load %arg6[%c0_12, %c0_13] : memref<24x128xf32, #tpu.memory_space<vmem>>, vector<24x128xf32>
    tpu.vector_store %arg6[%c0_12, %c0_13], %19 {strides = array<i32>} : memref<24x128xf32, #tpu.memory_space<vmem>>, vector<24x128xf32>,
    return
  }
  func.func @transform_0(%arg0: i32) -> (i32, i32) {
    %c0_i32 = arith.constant 0 : i32
    %c0_i32_0 = arith.constant 0 : i32
    return %arg0, %c0_i32 : i32, i32
  }
  func.func @transform_1(%arg0: i32) -> (i32, i32) {
    %c0_i32 = arith.constant 0 : i32
    %c0_i32_0 = arith.constant 0 : i32
    %c0_i32_1 = arith.constant 0 : i32
    return %c0_i32, %c0_i32_0 : i32, i32
  }
  func.func @transform_2(%arg0: i32) -> (i32, i32) {
    %c0_i32 = arith.constant 0 : i32
    %c0_i32_0 = arith.constant 0 : i32
    %c0_i32_1 = arith.constant 0 : i32
    return %c0_i32, %c0_i32_0 : i32, i32
  }
  func.func @transform_3(%arg0: i32) -> (i32, i32) {
    %c0_i32 = arith.constant 0 : i32
    %c0_i32_0 = arith.constant 0 : i32
    %c0_i32_1 = arith.constant 0 : i32
    return %c0_i32, %c0_i32_0 : i32, i32
  }
  func.func @transform_4(%arg0: i32) -> (i32, i32) {
    %c0_i32 = arith.constant 0 : i32
    %c0_i32_0 = arith.constant 0 : i32
    %c0_i32_1 = arith.constant 0 : i32
    return %c0_i32, %c0_i32_0 : i32, i32
  }
  func.func @transform_5(%arg0: i32) -> (i32, i32) {
    %c0_i32 = arith.constant 0 : i32
    %c0_i32_0 = arith.constant 0 : i32
    return %arg0, %c0_i32 : i32, i32
  }
}

</mosaic_0001>

<llo_original>
// kernel: tpu_custom_call.1
$region0: #{tpu_custom_call.1}
  #allocation0 [shape = 'u32[]', space=smem, size = 0x4, offset = 0x4, fixed_abs, tag = 'smem constant byte address 0x4 - core index']
  #allocation1 [shape = 'u32[144,128]{1,0:T(1,128)}', space=vmem, size = 0x12000, scoped, tag = 'internal scratch']
  %s0 = inlined_call_operand.hbm [shape: f32[24,128], index: 0, kind: input, shape index: {}]
  %s1 = inlined_call_operand.vmem [shape: f32[1,128], index: 1, kind: input, shape index: {}]
  %s2 = inlined_call_operand.vmem [shape: f32[1,128], index: 2, kind: input, shape index: {}]
  %s3 = inlined_call_operand.hbm [shape: f32[128,128], index: 3, kind: input, shape index: {}]
  %s4 = inlined_call_operand.hbm [shape: f32[128,128], index: 4, kind: input, shape index: {}]
  %s5 = inlined_call_operand.hbm [shape: f32[24,128], index: 5, kind: output, shape index: {}]
  %s6 = sld [smem:[#allocation0]]
  $region42: #{tpu_custom_call.1} parent=0
    _
  %s8 = ssub.s32 1, %s6
  %s9 = scalar_select 0, %s8, %s6
  $region1: #{tpu_custom_call.1} parent=0
    #allocation2 [shape = 'u8[12288]{0}', space=vmem, size = 0x3000, scoped, tag = 'input window, operand 0, single buffered']
    #allocation3 [shape = 's32[1]{0}', space=sflag, size = 0x4, scoped, tag = 'scoped memory for tpu_custom_call.1']
    #allocation4 [shape = 's32[1]{0}', space=sflag, size = 0x4, scoped, tag = 'scoped memory for tpu_custom_call.1']
    #allocation5 [shape = 'u8[65536]{0}', space=vmem, size = 0x10000, scoped, tag = 'input window, operand 3, single buffered']
    #allocation6 [shape = 's32[1]{0}', space=sflag, size = 0x4, scoped, tag = 'scoped memory for tpu_custom_call.1']
    #allocation7 [shape = 'u8[65536]{0}', space=vmem, size = 0x10000, scoped, tag = 'input window, operand 4, single buffered']
    #allocation8 [shape = 'u8[12288]{0}', space=vmem, size = 0x3000, scoped, tag = 'output window, operand 0, single buffered']
    %10 = vsyncpa [#allocation3], 0
    %11 = vsyncpa [#allocation6], 0
    %12 = vsyncpa [#allocation4], 0
    // Predicated region
    $region2: #{tpu_custom_call.1} parent=1 // pred_check
      _
    $region3: #{tpu_custom_call.1} parent=1 // pred_check_branch
      %14 = sbr.rel (0) target = $region5
    $region4: #{tpu_custom_call.1} parent=1 // pred_region
      %s16 = ssub.s32 384, 384
      %17 = vsyncadd [#allocation3], %s16
      %s18 = sshll.u32 [#allocation2], 4
      %s19 = int_to_ptr.vmem [resolvable:$true] %s18
      %24 = dma.hbm_to_vmem [thread:$0]  %s0, 384, %s19, [#allocation3], 128, 128, 8
    $region5: #{tpu_custom_call.1} parent=1 // pred_fallthru
      _
    // Predicated region
    $region6: #{tpu_custom_call.1} parent=1 // pred_check
      _
    $region7: #{tpu_custom_call.1} parent=1 // pred_check_branch
      %26 = sbr.rel (0) target = $region9
    $region8: #{tpu_custom_call.1} parent=1 // pred_region
      _
    $region9: #{tpu_custom_call.1} parent=1 // pred_fallthru
      _
    // Predicated region
    $region10: #{tpu_custom_call.1} parent=1 // pred_check
      _
    $region11: #{tpu_custom_call.1} parent=1 // pred_check_branch
      %28 = sbr.rel (0) target = $region13
    $region12: #{tpu_custom_call.1} parent=1 // pred_region
      _
    $region13: #{tpu_custom_call.1} parent=1 // pred_fallthru
      _
    // Predicated region
    $region14: #{tpu_custom_call.1} parent=1 // pred_check
      _
    $region15: #{tpu_custom_call.1} parent=1 // pred_check_branch
      %30 = sbr.rel (0) target = $region17
    $region16: #{tpu_custom_call.1} parent=1 // pred_region
      %s32 = ssub.s32 2048, 2048
      %33 = vsyncadd [#allocation6], %s32
      %s34 = sshll.u32 [#allocation5], 4
      %s35 = int_to_ptr.vmem [resolvable:$true] %s34
      %40 = dma.hbm_to_vmem [thread:$0]  %s3, 2048, %s35, [#allocation6], 128, 128, 8
    $region17: #{tpu_custom_call.1} parent=1 // pred_fallthru
      _
    // Predicated region
    $region18: #{tpu_custom_call.1} parent=1 // pred_check
      _
    $region19: #{tpu_custom_call.1} parent=1 // pred_check_branch
      %42 = sbr.rel (0) target = $region21
    $region20: #{tpu_custom_call.1} parent=1 // pred_region
      %s44 = ssub.s32 2048, 2048
      %45 = vsyncadd [#allocation6], %s44
      %s46 = sshll.u32 [#allocation7], 4
      %s47 = int_to_ptr.vmem [resolvable:$true] %s46
      %52 = dma.hbm_to_vmem [thread:$0]  %s4, 2048, %s47, [#allocation6], 128, 128, 8
    $region21: #{tpu_custom_call.1} parent=1 // pred_fallthru
      _
    // Predicated region
    $region22: #{tpu_custom_call.1} parent=1 // pred_check
      _
    $region23: #{tpu_custom_call.1} parent=1 // pred_check_branch
      %54 = sbr.rel (0) target = $region25
    $region24: #{tpu_custom_call.1} parent=1 // pred_region
      %55 = dma.done [#allocation3], 384
    $region25: #{tpu_custom_call.1} parent=1 // pred_fallthru
      _
    // Predicated region
    $region26: #{tpu_custom_call.1} parent=1 // pred_check
      _
    $region27: #{tpu_custom_call.1} parent=1 // pred_check_branch
      %57 = sbr.rel (0) target = $region29
    $region28: #{tpu_custom_call.1} parent=1 // pred_region
      %58 = dma.done [#allocation6], 2048
    $region29: #{tpu_custom_call.1} parent=1 // pred_fallthru
      _
    // Predicated region
    $region30: #{tpu_custom_call.1} parent=1 // pred_check
      _
    $region31: #{tpu_custom_call.1} parent=1 // pred_check_branch
      %60 = sbr.rel (0) target = $region33
    $region32: #{tpu_custom_call.1} parent=1 // pred_region
      %61 = dma.done [#allocation6], 2048
    $region33: #{tpu_custom_call.1} parent=1 // pred_fallthru
      _
    %v62 = vld [vmem:[#allocation2] sm:$0xff]
    %v63 = vld [vmem:[#allocation2 + $0x8] sm:$0xff]
    %v64 = vld [vmem:[#allocation2 + $0x10] sm:$0xff]
    %v65 = vld [vmem:[#allocation5] sm:$0xff]
    %v66 = vld [vmem:[#allocation5 + $0x8] sm:$0xff]
    %v67 = vld [vmem:[#allocation5 + $0x10] sm:$0xff]
    %v68 = vld [vmem:[#allocation5 + $0x18] sm:$0xff]
    %v69 = vld [vmem:[#allocation5 + $0x20] sm:$0xff]
    %v70 = vld [vmem:[#allocation5 + $0x28] sm:$0xff]
    %v71 = vld [vmem:[#allocation5 + $0x30] sm:$0xff]
    %v72 = vld [vmem:[#allocation5 + $0x38] sm:$0xff]
    %v73 = vld [vmem:[#allocation5 + $0x40] sm:$0xff]
    %v74 = vld [vmem:[#allocation5 + $0x48] sm:$0xff]
    %v75 = vld [vmem:[#allocation5 + $0x50] sm:$0xff]
    %v76 = vld [vmem:[#allocation5 + $0x58] sm:$0xff]
    %v77 = vld [vmem:[#allocation5 + $0x60] sm:$0xff]
    %v78 = vld [vmem:[#allocation5 + $0x68] sm:$0xff]
    %v79 = vld [vmem:[#allocation5 + $0x70] sm:$0xff]
    %v80 = vld [vmem:[#allocation5 + $0x78] sm:$0xff]
    %81 = vmatprep.subr.mxu0 0.0
    %82 = vmatpush1.msra.mxu0 %v80
    %83 = vmatprep.subr.mxu0 0.0
    %84 = vmatpush1.msra.mxu0 %v79
    %85 = vmatprep.subr.mxu0 0.0
    %86 = vmatpush1.msra.mxu0 %v78
    %87 = vmatprep.subr.mxu0 0.0
    %88 = vmatpush1.msra.mxu0 %v77
    %89 = vmatprep.subr.mxu0 0.0
    %90 = vmatpush1.msra.mxu0 %v76
    %91 = vmatprep.subr.mxu0 0.0
    %92 = vmatpush1.msra.mxu0 %v75
    %93 = vmatprep.subr.mxu0 0.0
    %94 = vmatpush1.msra.mxu0 %v74
    %95 = vmatprep.subr.mxu0 0.0
    %96 = vmatpush1.msra.mxu0 %v73
    %97 = vmatprep.subr.mxu0 0.0
    %98 = vmatpush1.msra.mxu0 %v72
    %99 = vmatprep.subr.mxu0 0.0
    %100 = vmatpush1.msra.mxu0 %v71
    %101 = vmatprep.subr.mxu0 0.0
    %102 = vmatpush1.msra.mxu0 %v70
    %103 = vmatprep.subr.mxu0 0.0
    %104 = vmatpush1.msra.mxu0 %v69
    %105 = vmatprep.subr.mxu0 0.0
    %106 = vmatpush1.msra.mxu0 %v68
    %107 = vmatprep.subr.mxu0 0.0
    %108 = vmatpush1.msra.mxu0 %v67
    %109 = vmatprep.subr.mxu0 0.0
    %110 = vmatpush1.msra.mxu0 %v66
    %111 = vmatprep.subr.mxu0 0.0
    %112 = vmatpush1.msra.mxu0 %v65
    %113 = vmatprep.subr.mxu0 0.0
    %114 = vmatpush2.msra.mxu0 0.0
    %115 = vmatprep.subr.mxu0 0.0
    %116 = vmatpush2.msra.mxu0 0.0
    %117 = vmatprep.subr.mxu0 0.0
    %118 = vmatpush2.msra.mxu0 0.0
    %119 = vmatprep.subr.mxu0 0.0
    %120 = vmatpush2.msra.mxu0 0.0
    %121 = vmatprep.subr.mxu0 0.0
    %122 = vmatpush2.msra.mxu0 0.0
    %123 = vmatprep.subr.mxu0 0.0
    %124 = vmatpush2.msra.mxu0 0.0
    %125 = vmatprep.subr.mxu0 0.0
    %126 = vmatpush2.msra.mxu0 0.0
    %127 = vmatprep.subr.mxu0 0.0
    %128 = vmatpush2.msra.mxu0 0.0
    %129 = vmatprep.subr.mxu0 0.0
    %130 = vmatpush2.msra.mxu0 0.0
    %131 = vmatprep.subr.mxu0 0.0
    %132 = vmatpush2.msra.mxu0 0.0
    %133 = vmatprep.subr.mxu0 0.0
    %134 = vmatpush2.msra.mxu0 0.0
    %135 = vmatprep.subr.mxu0 0.0
    %136 = vmatpush2.msra.mxu0 0.0
    %137 = vmatprep.subr.mxu0 0.0
    %138 = vmatpush2.msra.mxu0 0.0
    %139 = vmatprep.subr.mxu0 0.0
    %140 = vmatpush2.msra.mxu0 0.0
    %141 = vmatprep.subr.mxu0 0.0
    %142 = vmatpush2.msra.mxu0 0.0
    %143 = vmatprep.subr.mxu0 0.0
    %144 = vmatpush2.msra.mxu0 0.0
    %145 = vmatprep.mubr.f32.mxu0 0.0
    %146 = vmatmul.mubr.f32.gmra.mxu0 %v62
    %v147 = vpop.f32.mrf.mxu0
    %v148 = vadd.f32 0.0, %v147
    %v149 = vpop.f32.mrf.mxu0
    %150 = vmatprep.mubr.f32.mxu0 0.0
    %151 = vmatmul.mubr.f32.gmra.mxu0 %v63
    %v152 = vpop.f32.mrf.mxu0
    %v153 = vadd.f32 0.0, %v152
    %v154 = vpop.f32.mrf.mxu0
    %155 = vmatprep.mubr.f32.mxu0 0.0
    %156 = vmatmul.mubr.f32.gmra.mxu0 %v64
    %v157 = vpop.f32.mrf.mxu0
    %v158 = vadd.f32 0.0, %v157
    %v159 = vpop.f32.mrf.mxu0
    %160 = vdwg.mxu0
    %v161 = vsub.f32 %v62, %v148
    %v162 = vsub.f32 %v63, %v153
    %v163 = vsub.f32 %v64, %v158
    %v164 = vmul.f32 %v161, %v161
    %v165 = vmul.f32 %v162, %v162
    %v166 = vmul.f32 %v163, %v163
    %v167 = vld [vmem:[#allocation7] sm:$0xff]
    %v168 = vld [vmem:[#allocation7 + $0x8] sm:$0xff]
    %v169 = vld [vmem:[#allocation7 + $0x10] sm:$0xff]
    %v170 = vld [vmem:[#allocation7 + $0x18] sm:$0xff]
    %v171 = vld [vmem:[#allocation7 + $0x20] sm:$0xff]
    %v172 = vld [vmem:[#allocation7 + $0x28] sm:$0xff]
    %v173 = vld [vmem:[#allocation7 + $0x30] sm:$0xff]
    %v174 = vld [vmem:[#allocation7 + $0x38] sm:$0xff]
    %v175 = vld [vmem:[#allocation7 + $0x40] sm:$0xff]
    %v176 = vld [vmem:[#allocation7 + $0x48] sm:$0xff]
    %v177 = vld [vmem:[#allocation7 + $0x50] sm:$0xff]
    %v178 = vld [vmem:[#allocation7 + $0x58] sm:$0xff]
    %v179 = vld [vmem:[#allocation7 + $0x60] sm:$0xff]
    %v180 = vld [vmem:[#allocation7 + $0x68] sm:$0xff]
    %v181 = vld [vmem:[#allocation7 + $0x70] sm:$0xff]
    %v182 = vld [vmem:[#allocation7 + $0x78] sm:$0xff]
    %183 = vmatprep.subr.mxu0 0.0
    %184 = vmatpush1.msra.mxu0 %v182
    %185 = vmatprep.subr.mxu0 0.0
    %186 = vmatpush1.msra.mxu0 %v181
    %187 = vmatprep.subr.mxu0 0.0
    %188 = vmatpush1.msra.mxu0 %v180
    %189 = vmatprep.subr.mxu0 0.0
    %190 = vmatpush1.msra.mxu0 %v179
    %191 = vmatprep.subr.mxu0 0.0
    %192 = vmatpush1.msra.mxu0 %v178
    %193 = vmatprep.subr.mxu0 0.0
    %194 = vmatpush1.msra.mxu0 %v177
    %195 = vmatprep.subr.mxu0 0.0
    %196 = vmatpush1.msra.mxu0 %v176
    %197 = vmatprep.subr.mxu0 0.0
    %198 = vmatpush1.msra.mxu0 %v175
    %199 = vmatprep.subr.mxu0 0.0
    %200 = vmatpush1.msra.mxu0 %v174
    %201 = vmatprep.subr.mxu0 0.0
    %202 = vmatpush1.msra.mxu0 %v173
    %203 = vmatprep.subr.mxu0 0.0
    %204 = vmatpush1.msra.mxu0 %v172
    %205 = vmatprep.subr.mxu0 0.0
    %206 = vmatpush1.msra.mxu0 %v171
    %207 = vmatprep.subr.mxu0 0.0
    %208 = vmatpush1.msra.mxu0 %v170
    %209 = vmatprep.subr.mxu0 0.0
    %210 = vmatpush1.msra.mxu0 %v169
    %211 = vmatprep.subr.mxu0 0.0
    %212 = vmatpush1.msra.mxu0 %v168
    %213 = vmatprep.subr.mxu0 0.0
    %214 = vmatpush1.msra.mxu0 %v167
    %215 = vmatprep.subr.mxu0 0.0
    %216 = vmatpush2.msra.mxu0 0.0
    %217 = vmatprep.subr.mxu0 0.0
    %218 = vmatpush2.msra.mxu0 0.0
    %219 = vmatprep.subr.mxu0 0.0
    %220 = vmatpush2.msra.mxu0 0.0
    %221 = vmatprep.subr.mxu0 0.0
    %222 = vmatpush2.msra.mxu0 0.0
    %223 = vmatprep.subr.mxu0 0.0
    %224 = vmatpush2.msra.mxu0 0.0
    %225 = vmatprep.subr.mxu0 0.0
    %226 = vmatpush2.msra.mxu0 0.0
    %227 = vmatprep.subr.mxu0 0.0
    %228 = vmatpush2.msra.mxu0 0.0
    %229 = vmatprep.subr.mxu0 0.0
    %230 = vmatpush2.msra.mxu0 0.0
    %231 = vmatprep.subr.mxu0 0.0
    %232 = vmatpush2.msra.mxu0 0.0
    %233 = vmatprep.subr.mxu0 0.0
    %234 = vmatpush2.msra.mxu0 0.0
    %235 = vmatprep.subr.mxu0 0.0
    %236 = vmatpush2.msra.mxu0 0.0
    %237 = vmatprep.subr.mxu0 0.0
    %238 = vmatpush2.msra.mxu0 0.0
    %239 = vmatprep.subr.mxu0 0.0
    %240 = vmatpush2.msra.mxu0 0.0
    %241 = vmatprep.subr.mxu0 0.0
    %242 = vmatpush2.msra.mxu0 0.0
    %243 = vmatprep.subr.mxu0 0.0
    %244 = vmatpush2.msra.mxu0 0.0
    %245 = vmatprep.subr.mxu0 0.0
    %246 = vmatpush2.msra.mxu0 0.0
    %247 = vmatprep.mubr.f32.mxu0 0.0
    %248 = vmatmul.mubr.f32.gmra.mxu0 %v164
    %v249 = vpop.f32.mrf.mxu0
    %v250 = vadd.f32 0.0, %v249
    %v251 = vpop.f32.mrf.mxu0
    %252 = vmatprep.mubr.f32.mxu0 0.0
    %253 = vmatmul.mubr.f32.gmra.mxu0 %v165
    %v254 = vpop.f32.mrf.mxu0
    %v255 = vadd.f32 0.0, %v254
    %v256 = vpop.f32.mrf.mxu0
    %257 = vmatprep.mubr.f32.mxu0 0.0
    %258 = vmatmul.mubr.f32.gmra.mxu0 %v166
    %v259 = vpop.f32.mrf.mxu0
    %v260 = vadd.f32 0.0, %v259
    %v261 = vpop.f32.mrf.mxu0
    %262 = vdwg.mxu0
    %v263 = vmul.f32 %v250, 0.032258064
    %v264 = vmul.f32 %v255, 0.032258064
    %v265 = vmul.f32 %v260, 0.032258064
    %v266 = vrsqrt.pop %v263
    %v267 = vmul.f32 %v263, %v266
    %vm268 = vcmp.eq.f32.partialorder %v263, inf
    %v269 = vsel %vm268, %v263, %v267
    %vm270 = vcmp.eq.f32.partialorder %v263, 0.0
    %v271 = vand.u32 %v263, 2147483648
    %v272 = vsel %vm270, %v271, %v269
    %v273 = vrsqrt.pop %v264
    %v274 = vmul.f32 %v264, %v273
    %vm275 = vcmp.eq.f32.partialorder %v264, inf
    %v276 = vsel %vm275, %v264, %v274
    %vm277 = vcmp.eq.f32.partialorder %v264, 0.0
    %v278 = vand.u32 %v264, 2147483648
    %v279 = vsel %vm277, %v278, %v276
    %v280 = vrsqrt.pop %v265
    %v281 = vmul.f32 %v265, %v280
    %vm282 = vcmp.eq.f32.partialorder %v265, inf
    %v283 = vsel %vm282, %v265, %v281
    %vm284 = vcmp.eq.f32.partialorder %v265, 0.0
    %v285 = vand.u32 %v265, 2147483648
    %v286 = vsel %vm284, %v285, %v283
    %v287 = vadd.f32 %v272, 1e-06
    %v288 = vadd.f32 %v279, 1e-06
    %v289 = vadd.f32 %v286, 1e-06
    %v290 = vrcp.pop %v287
    %v291 = vrcp.pop %v288
    %v292 = vrcp.pop %v289
    %v293 = vld [vmem:[%s1] sm:$0x1]
    %v295 = vlaneseq
    %v296 = vshrl.u32 %v295, 7
    %v297 = vsub.s32 0, %v296
    %v298 = vrot.slane %v293, %v297
    %v300 = vmul.f32 %v298, %v161
    %v301 = vmul.f32 %v298, %v162
    %v302 = vmul.f32 %v298, %v163
    %v303 = vmul.f32 %v300, %v290
    %v304 = vmul.f32 %v301, %v291
    %v305 = vmul.f32 %v302, %v292
    %v306 = vld [vmem:[%s2] sm:$0x1]
    %v308 = vlaneseq
    %v309 = vshrl.u32 %v308, 7
    %v310 = vsub.s32 0, %v309
    %v311 = vrot.slane %v306, %v310
    %v313 = vadd.f32 %v303, %v311
    %v314 = vadd.f32 %v304, %v311
    %v315 = vadd.f32 %v305, %v311
    %316 = vst [vmem:[#allocation8] sm:$0xff] %v313
    %317 = vst [vmem:[#allocation8 + $0x8] sm:$0xff] %v314
    %318 = vst [vmem:[#allocation8 + $0x10] sm:$0xff] %v315
    // Predicated region
    $region34: #{tpu_custom_call.1} parent=1 // pred_check
      _
    $region35: #{tpu_custom_call.1} parent=1 // pred_check_branch
      %320 = sbr.rel (0) target = $region37
    $region36: #{tpu_custom_call.1} parent=1 // pred_region
      %s322 = ssub.s32 384, 384
      %323 = vsyncadd [#allocation4], %s322
      %s324 = sshll.u32 [#allocation8], 4
      %s325 = int_to_ptr.vmem [resolvable:$true] %s324
      %330 = dma.vmem_to_hbm [thread:$0]  %s325, 384, %s5, [#allocation4], 128, 128, 8
    $region37: #{tpu_custom_call.1} parent=1 // pred_fallthru
      _
    // Predicated region
    $region38: #{tpu_custom_call.1} parent=1 // pred_check
      _
    $region39: #{tpu_custom_call.1} parent=1 // pred_check_branch
      %332 = sbr.rel (0) target = $region41
    $region40: #{tpu_custom_call.1} parent=1 // pred_region
      %333 = dma.done [#allocation4], 384
    $region41: #{tpu_custom_call.1} parent=1 // pred_fallthru
      _
    %334 = vsyncpa [#allocation3], 1
    %335 = vsyncpa [#allocation6], 1
    %336 = vsyncpa [#allocation4], 1

</llo_original>
